<compile_context>
chip_gen: v7x
topology: tpu7x:2x2x1
jax: 0.10.0
libtpu: 0.0.40
codegen_flags: <defaults>
</compile_context>

<pallas_src>
import jax
import jax.numpy as jnp
from jax import lax
from jax.experimental import pallas as pl
from jax.experimental.pallas import tpu as pltpu


def _critic_head_kernel(x_ref, w_ref, b_ref, o_ref):
    # x_ref: [TB, D] streamed batch tile (VMEM)
    # w_ref: [1, D]  resident lane-dense f32 weight row (VMEM)
    # b_ref: [1]     scalar f32 bias (SMEM)
    # o_ref: [1, TB] lane-dense output tile (VMEM)
    x = x_ref[...]
    w = w_ref[...]
    if w.dtype != x.dtype:
        # Tiny [1, D] cast (bf16-from-f32 weight) so the MXU sees matching
        # operand dtypes; never upcast the whole x tile.
        w = w.astype(x.dtype)
    # w @ x.T on the MXU with f32 accumulation. Contracting the last dim of
    # both operands (attention-logits style, transposed-rhs matmul) yields the
    # result directly in lane-dense [1, TB] layout, so the store below is an
    # unmasked full-lane store.
    acc = lax.dot_general(
        w, x,
        dimension_numbers=(((1,), (1,)), ((), ())),
        preferred_element_type=jnp.float32,
    )
    o_ref[...] = (acc + b_ref[0]).astype(o_ref.dtype)


def _round_up(n, m):
    return ((n + m - 1) // m) * m


def _round_down(n, m):
    return (n // m) * m


def _vmem_capacity_bytes():
    """Physical VMEM per TensorCore (128 MiB v5e/v6e, 64 MiB v7x)."""
    try:
        cap = getattr(pltpu.get_tpu_info(), "vmem_capacity_bytes", None)
        if cap:
            return int(cap)
    except Exception:
        pass
    return 64 << 20  # conservative (v7x) if the query is unavailable


def _footprint_bytes(tb, D, x_itemsize, out_itemsize):
    """VMEM footprint of one pipelined grid step (double-buffered tiles)."""
    x_bytes = 2 * tb * D * x_itemsize                       # x tile, 2x buffered
    out_bytes = 2 * 8 * _round_up(tb, 128) * out_itemsize   # (1, tb) out tile, padded
    acc_bytes = 8 * _round_up(tb, 128) * 4                  # f32 matmul result
    w_bytes = 2 * 8 * _round_up(D, 128) * 4                 # resident f32 weight row
    return x_bytes + out_bytes + acc_bytes + w_bytes + (2 << 20)  # + compiler slack


def _choose_block_rows(B, D, x_itemsize, out_itemsize, target_bytes, budget_cap,
                       requested=None, min_steps=4):
    """Pick the batch tile: ~target_bytes of x per step, >= min_steps grid steps,
    a multiple of 128 (lane-dense output block) unless it covers the full batch,
    and always within the per-generation VMEM budget (tb is clamped, never the
    declared VMEM limit)."""
    per_row = 2 * D * x_itemsize + 2 * 8 * out_itemsize + 8 * 4
    fixed = 2 * 8 * _round_up(D, 128) * 4 + (2 << 20)
    rows_cap = max(1, (budget_cap - fixed) // per_row)

    if requested is not None:
        tb = int(requested)
    else:
        rows_by_bytes = max(1, target_bytes // max(1, D * x_itemsize))
        # Keep the 1-D grid at >= min_steps steps so dual-TC v7x gets both
        # cores fed under dimension_semantics=("parallel",) and the double
        # buffer stays warm.
        rows_by_steps = pl.cdiv(B, min_steps)
        tb = min(rows_by_bytes, rows_by_steps)
    tb = min(tb, rows_cap)

    if tb >= B and B <= rows_cap:
        return B           # single full-batch block: block dims == array dims
    tb = max(128, _round_down(tb, 128))
    tb = min(tb, max(128, _round_down(rows_cap, 128)))
    if tb >= B:
        return B
    return tb


def critic_head(x, weight, bias, *, block_rows=None, use_pallas=None,
                min_pallas_bytes=4 << 20):
    """Pallas implementation of CriticHead.forward.

    Args:
      x:      [B, D] input features.
      weight: [1, D] linear weight (PyTorch nn.Linear convention).
      bias:   [1]    linear bias.
      block_rows: optional batch-tile hint (rounded down to a multiple of 128
        and clamped to the per-generation VMEM budget).
    Returns:
      [B, 1] critic value (same dtype as x).
    """
    B, D = x.shape
    assert weight.shape == (1, D), weight.shape
    assert bias.shape == (1,), bias.shape

    x_itemsize = jnp.dtype(x.dtype).itemsize
    out_itemsize = x_itemsize

    if use_pallas is None:
        # Below a few MiB the custom-call launch cost and the lost XLA fusion
        # with the layer producing x outweigh any kernel benefit.
        use_pallas = (B * D * x_itemsize) >= min_pallas_bytes

    w = weight.astype(jnp.float32)            # master weight stays f32 (only D*4 bytes)
    b = bias.reshape(1).astype(jnp.float32)

    def _xla_fallback():
        acc = jnp.dot(x, w.T, preferred_element_type=jnp.float32)
        return (acc + b).astype(x.dtype)

    if not use_pallas:
        return _xla_fallback()

    # Generation-gated tiling: bigger tiles / budget on 128-MiB parts (v5e/v6e),
    # smaller on 64-MiB-per-TC v7x.
    vmem_cap = _vmem_capacity_bytes()
    if vmem_cap >= (100 << 20):
        target_bytes, budget_cap = 24 << 20, 100 << 20
    else:
        target_bytes, budget_cap = 16 << 20, 56 << 20

    tb = _choose_block_rows(B, D, x_itemsize, out_itemsize, target_bytes,
                            budget_cap, requested=block_rows)
    footprint = _footprint_bytes(tb, D, x_itemsize, out_itemsize)
    if footprint > vmem_cap:
        # Even the smallest legal tile does not fit on this generation
        # (pathologically large D) -> stay on the fused XLA path.
        return _xla_fallback()
    # Never declare a limit below the real footprint (tb was clamped instead).
    vmem_limit = int(min(budget_cap, max(footprint, 16 << 20)))

    grid = (pl.cdiv(B, tb),)
    # NOTE: the last grid step may be a partial batch tile (B % tb != 0). That
    # is safe: the reduction runs only over the (always full) D axis and Pallas
    # masks the partial-tile output lanes on writeback.

    cost = pl.CostEstimate(
        flops=2 * B * D,
        transcendentals=0,
        bytes_accessed=B * D * x_itemsize + D * 4 + B * out_itemsize,
    )

    out = pl.pallas_call(
        _critic_head_kernel,
        out_shape=jax.ShapeDtypeStruct((1, B), x.dtype),        # lane-dense output
        grid=grid,
        in_specs=[
            pl.BlockSpec((tb, D), lambda i: (i, 0)),            # x: streamed batch tiles
            pl.BlockSpec((1, D), lambda i: (0, 0)),             # w: resident f32 row
            pl.BlockSpec(memory_space=pltpu.MemorySpace.SMEM),  # b: scalar in SMEM
        ],
        out_specs=pl.BlockSpec((1, tb), lambda i: (0, i)),
        compiler_params=pltpu.CompilerParams(
            # Batch tiles are independent -> shard grid steps across both TCs
            # on dual-TC v7x (no-op on single-TC v5e/v6e). If xprof shows one
            # TC doing every step, switch to pltpu.CORE_PARALLEL.
            dimension_semantics=("parallel",),
            vmem_limit_bytes=vmem_limit,
        ),
        cost_estimate=cost,
    )(x, w, b)
    return out.reshape(B, 1)


def init_critic_head_params(key, input_size, dtype=jnp.float32):
    """Deterministic init matching nn.init.orthogonal_ / constant_(0).

    For a [1, input_size] matrix, orthogonal init reduces to a unit-L2-norm
    row vector; bias is zeros.
    """
    w = jax.random.normal(key, (1, input_size), dtype=jnp.float32)
    w = w / jnp.linalg.norm(w)
    b = jnp.zeros((1,), dtype=jnp.float32)
    return w.astype(dtype), b.astype(dtype)


if __name__ == "__main__":
    key = jax.random.PRNGKey(0)
    k_x, k_w, k_x2, k_x3 = jax.random.split(key, 4)

    # --- tiny demo shape implied by the module (batch=2, input_size=32) ---
    batch, input_size = 2, 32
    x = jax.random.normal(k_x, (batch, input_size), dtype=jnp.float32)
    weight, bias = init_critic_head_params(k_w, input_size)

    out = critic_head(x, weight, bias, use_pallas=True)   # force the Pallas path
    out = jax.block_until_ready(out)
    ref = x @ weight.T + bias
    assert out.shape == (batch, 1), out.shape
    assert jnp.allclose(out, ref, atol=1e-5, rtol=1e-5), (out, ref)

    # --- tiled path: multiple grid steps with a partial last tile (B % TB != 0) ---
    B2, D2, TB2 = 1050, 128, 256          # grid = 5 steps, last tile = 26 valid rows
    x2 = jax.random.normal(k_x2, (B2, D2), dtype=jnp.float32)
    w2, b2 = init_critic_head_params(k_w, D2)
    out2 = jax.block_until_ready(
        critic_head(x2, w2, b2, block_rows=TB2, use_pallas=True))
    ref2 = x2 @ w2.T + b2
    assert out2.shape == (B2, 1), out2.shape
    assert jnp.allclose(out2, ref2, atol=1e-4, rtol=1e-4)

    # --- bf16 activations against the f32 master weight (MXU bf16-in/f32-acc) ---
    B3, D3, TB3 = 2048, 256, 512          # grid = 4 steps, no partial tile
    x3 = jax.random.normal(k_x3, (B3, D3), dtype=jnp.float32).astype(jnp.bfloat16)
    w3, b3 = init_critic_head_params(k_w, D3)
    out3 = jax.block_until_ready(
        critic_head(x3, w3, b3, block_rows=TB3, use_pallas=True))
    ref3 = (x3.astype(jnp.float32)
            @ w3.astype(jnp.bfloat16).astype(jnp.float32).T + b3)
    assert out3.shape == (B3, 1), out3.shape
    assert jnp.allclose(out3.astype(jnp.float32), ref3, atol=5e-2, rtol=5e-2)

    print("KERNEL_OK")
</pallas_src>

<mosaic_0001>
module attributes {stable_mosaic.version = 11 : i64} {
  func.func @_critic_head_kernel(%arg0: i32, %arg1: memref<2x32xf32, #tpu.memory_space<vmem>>, %arg2: memref<1x32xf32, #tpu.memory_space<vmem>>, %arg3: memref<1xf32, #tpu.memory_space<smem>>, %arg4: memref<1x2xf32, #tpu.memory_space<vmem>>) attributes {dimension_semantics = [#tpu.dimension_semantics<parallel>], iteration_bounds = array<i64: 1>, scalar_prefetch = 0 : i64, scratch_operands = 0 : i64, tpu.core_type = #tpu.core_type<tc>, window_params = [{transform_indices = @transform_0, window_bounds = array<i64: 2, 32>}, {pipeline_mode = #tpu.pipeline_mode<synchronous>, transform_indices = @transform_1, window_bounds = array<i64: 1, 32>}, {transform_indices = @transform_2, window_bounds = array<i64: 1>}, {transform_indices = @transform_3, window_bounds = array<i64: 1, 2>}]} {
    %c0 = arith.constant 0 : index
    %c0_0 = arith.constant 0 : index
    %0 = vector.load %arg1[%c0, %c0_0] : memref<2x32xf32, #tpu.memory_space<vmem>>, vector<2x32xf32>
    %c0_1 = arith.constant 0 : index
    %c0_2 = arith.constant 0 : index
    %1 = vector.load %arg2[%c0_1, %c0_2] : memref<1x32xf32, #tpu.memory_space<vmem>>, vector<1x32xf32>
    %cst = arith.constant dense<0.000000e+00> : vector<1x2xf32>
    %2 = tpu.matmul %1, %0, %cst {dimension_numbers = #tpu.dot_dimension_numbers<[1], [1], [0], [0], [0, 0, 1, 0], [], []>} : vector<1x32xf32>, vector<2x32xf32>, vector<1x2xf32> -> vector<1x2xf32>
    %c0_3 = arith.constant 0 : index
    %3 = memref.load %arg3[%c0_3] : memref<1xf32, #tpu.memory_space<smem>>
    %4 = vector.broadcast %3 : f32 to vector<1x2xf32>
    %5 = arith.addf %2, %4 : vector<1x2xf32>
    %c0_4 = arith.constant 0 : index
    %c0_5 = arith.constant 0 : index
    %6 = vector.load %arg4[%c0_4, %c0_5] : memref<1x2xf32, #tpu.memory_space<vmem>>, vector<1x2xf32>
    tpu.vector_store %arg4[%c0_4, %c0_5], %5 {strides = array<i32>} : memref<1x2xf32, #tpu.memory_space<vmem>>, vector<1x2xf32>,
    return
  }
  func.func @transform_0(%arg0: i32) -> (i32, i32) {
    %c0_i32 = arith.constant 0 : i32
    %c0_i32_0 = arith.constant 0 : i32
    return %arg0, %c0_i32 : i32, i32
  }
  func.func @transform_1(%arg0: i32) -> (i32, i32) {
    %c0_i32 = arith.constant 0 : i32
    %c0_i32_0 = arith.constant 0 : i32
    %c0_i32_1 = arith.constant 0 : i32
    return %c0_i32, %c0_i32_0 : i32, i32
  }
  func.func @transform_2(%arg0: i32) -> i32 {
    %c0_i32 = arith.constant 0 : i32
    %c0_i32_0 = arith.constant 0 : i32
    return %c0_i32 : i32
  }
  func.func @transform_3(%arg0: i32) -> (i32, i32) {
    %c0_i32 = arith.constant 0 : i32
    %c0_i32_0 = arith.constant 0 : i32
    return %c0_i32, %arg0 : i32, i32
  }
}

</mosaic_0001>

<llo_original>
// kernel: tpu_custom_call.1
$region0: #{tpu_custom_call.1}
  #allocation0 [shape = 'u32[]', space=smem, size = 0x4, offset = 0x4, fixed_abs, tag = 'smem constant byte address 0x4 - core index']
  #allocation1 [shape = 'u32[144,128]{1,0:T(1,128)}', space=vmem, size = 0x12000, scoped, tag = 'internal scratch']
  #allocation2 [shape = 'f32[1]{0:T(128)S(6)}', space=smem, size = 0x200, scoped, tag = 'scoped memory for tpu_custom_call.1']
  %s0 = inlined_call_operand.vmem [shape: f32[2,32], index: 0, kind: input, shape index: {}]
  %s1 = inlined_call_operand.vmem [shape: f32[1,32], index: 1, kind: input, shape index: {}]
  %s2 = inlined_call_operand.<no memory space> [shape: f32[1], index: 2, kind: input, shape index: {}]
  %s3 = inlined_call_operand.hbm [shape: f32[1,2], index: 3, kind: output, shape index: {}]
  %s4 = sld [smem:[#allocation0]]
  $region22: #{tpu_custom_call.1} parent=0
    _
  %s6 = ssub.s32 1, %s4
  %s7 = scalar_select 0, %s6, %s4
  %8 = sst [smem:[#allocation2]] %s2
  $region1: #{tpu_custom_call.1} parent=0
    #allocation3 [shape = 'u8[512]{0}', space=vmem, size = 0x400, scoped, tag = 'output window, operand 0, single buffered']
    #allocation4 [shape = 's32[1]{0}', space=sflag, size = 0x4, scoped, tag = 'scoped memory for tpu_custom_call.1']
    %9 = vsyncpa [#allocation4], 0
    // Predicated region
    $region2: #{tpu_custom_call.1} parent=1 // pred_check
      _
    $region3: #{tpu_custom_call.1} parent=1 // pred_check_branch
      %11 = sbr.rel (0) target = $region5
    $region4: #{tpu_custom_call.1} parent=1 // pred_region
      _
    $region5: #{tpu_custom_call.1} parent=1 // pred_fallthru
      _
    // Predicated region
    $region6: #{tpu_custom_call.1} parent=1 // pred_check
      _
    $region7: #{tpu_custom_call.1} parent=1 // pred_check_branch
      %13 = sbr.rel (0) target = $region9
    $region8: #{tpu_custom_call.1} parent=1 // pred_region
      _
    $region9: #{tpu_custom_call.1} parent=1 // pred_fallthru
      _
    // Predicated region
    $region10: #{tpu_custom_call.1} parent=1 // pred_check
      _
    $region11: #{tpu_custom_call.1} parent=1 // pred_check_branch
      %15 = sbr.rel (0) target = $region13
    $region12: #{tpu_custom_call.1} parent=1 // pred_region
      _
    $region13: #{tpu_custom_call.1} parent=1 // pred_fallthru
      _
    %v16 = vld [vmem:[%s0] sm:$0x3]
    %v17 = vld [vmem:[%s1] sm:$0x1]
    %s18 = sld [smem:[#allocation2]]
    %v19 = vstv %s18
    %vm20 = vcmask 261120
    %v22 = vsel %vm20, %v17, 0
    %v25 = vsel %vm20, %v16, 0
    %27 = vmatprep.subr.mxu0 0.0
    %28 = vmatpush1.xpose.msra.mxu0 %v25
    %29 = vmatprep.subr.mxu0 0.0
    %30 = vmatpush1.xpose.msra.mxu0 0.0
    %31 = vmatprep.subr.mxu0 0.0
    %32 = vmatpush1.xpose.msra.mxu0 0.0
    %33 = vmatprep.subr.mxu0 0.0
    %34 = vmatpush1.xpose.msra.mxu0 0.0
    %35 = vmatprep.subr.mxu0 0.0
    %36 = vmatpush1.xpose.msra.mxu0 0.0
    %37 = vmatprep.subr.mxu0 0.0
    %38 = vmatpush1.xpose.msra.mxu0 0.0
    %39 = vmatprep.subr.mxu0 0.0
    %40 = vmatpush1.xpose.msra.mxu0 0.0
    %41 = vmatprep.subr.mxu0 0.0
    %42 = vmatpush1.xpose.msra.mxu0 0.0
    %43 = vmatprep.subr.mxu0 0.0
    %44 = vmatpush1.xpose.msra.mxu0 0.0
    %45 = vmatprep.subr.mxu0 0.0
    %46 = vmatpush1.xpose.msra.mxu0 0.0
    %47 = vmatprep.subr.mxu0 0.0
    %48 = vmatpush1.xpose.msra.mxu0 0.0
    %49 = vmatprep.subr.mxu0 0.0
    %50 = vmatpush1.xpose.msra.mxu0 0.0
    %51 = vmatprep.subr.mxu0 0.0
    %52 = vmatpush1.xpose.msra.mxu0 0.0
    %53 = vmatprep.subr.mxu0 0.0
    %54 = vmatpush1.xpose.msra.mxu0 0.0
    %55 = vmatprep.subr.mxu0 0.0
    %56 = vmatpush1.xpose.msra.mxu0 0.0
    %57 = vmatprep.subr.mxu0 0.0
    %58 = vmatpush1.xpose.msra.mxu0 0.0
    %59 = vmatprep.subr.mxu0 0.0
    %60 = vmatpush1.xpose.msra.mxu0 0.0
    %61 = vmatprep.subr.mxu0 0.0
    %62 = vmatpush1.xpose.msra.mxu0 0.0
    %63 = vmatprep.subr.mxu0 0.0
    %64 = vmatpush1.xpose.msra.mxu0 0.0
    %65 = vmatprep.subr.mxu0 0.0
    %66 = vmatpush1.xpose.msra.mxu0 0.0
    %67 = vmatprep.subr.mxu0 0.0
    %68 = vmatpush1.xpose.msra.mxu0 0.0
    %69 = vmatprep.subr.mxu0 0.0
    %70 = vmatpush1.xpose.msra.mxu0 0.0
    %71 = vmatprep.subr.mxu0 0.0
    %72 = vmatpush1.xpose.msra.mxu0 0.0
    %73 = vmatprep.subr.mxu0 0.0
    %74 = vmatpush1.xpose.msra.mxu0 0.0
    %75 = vmatprep.subr.mxu0 0.0
    %76 = vmatpush1.xpose.msra.mxu0 0.0
    %77 = vmatprep.subr.mxu0 0.0
    %78 = vmatpush1.xpose.msra.mxu0 0.0
    %79 = vmatprep.subr.mxu0 0.0
    %80 = vmatpush1.xpose.msra.mxu0 0.0
    %81 = vmatprep.subr.mxu0 0.0
    %82 = vmatpush1.xpose.msra.mxu0 0.0
    %83 = vmatprep.subr.mxu0 0.0
    %84 = vmatpush1.xpose.msra.mxu0 0.0
    %85 = vmatprep.subr.mxu0 0.0
    %86 = vmatpush1.xpose.msra.mxu0 0.0
    %87 = vmatprep.subr.mxu0 0.0
    %88 = vmatpush1.xpose.msra.mxu0 0.0
    %89 = vmatprep.subr.mxu0 0.0
    %90 = vmatpush1.xpose.msra.mxu0 0.0
    %91 = vmatprep.mubr.f32.mxu0 0.0
    %92 = vmatmul.mubr.f32.gmra.mrb[0].mxu0 %v22
    %v93 = vpop.f32.mrb[0].mxu0
    %v94 = vadd.f32 %v19, %v93
    %v95 = vpop.f32.mrb[0].mxu0
    %96 = vdwg.mxu0
    %vm97 = vcmask 8192
    %98 = vst.msk [vmem:[#allocation3] sm:$0x1] %vm97, %v94
    // Predicated region
    $region14: #{tpu_custom_call.1} parent=1 // pred_check
      _
    $region15: #{tpu_custom_call.1} parent=1 // pred_check_branch
      %100 = sbr.rel (0) target = $region17
    $region16: #{tpu_custom_call.1} parent=1 // pred_region
      %s102 = ssub.s32 16, 16
      %103 = vsyncadd [#allocation4], %s102
      %s105 = sshll.u32 [#allocation3], 4
      %s106 = int_to_ptr.vmem [resolvable:$true] %s105
      %108 = dma.vmem_to_hbm [thread:$0]  %s106, 16, %s3, [#allocation4]
    $region17: #{tpu_custom_call.1} parent=1 // pred_fallthru
      _
    // Predicated region
    $region18: #{tpu_custom_call.1} parent=1 // pred_check
      _
    $region19: #{tpu_custom_call.1} parent=1 // pred_check_branch
      %110 = sbr.rel (0) target = $region21
    $region20: #{tpu_custom_call.1} parent=1 // pred_region
      %111 = dma.done [#allocation4], 16
    $region21: #{tpu_custom_call.1} parent=1 // pred_fallthru
      _
    %112 = vsyncpa [#allocation4], 1

</llo_original>
